<compile_context>
chip_gen: v7x
topology: tpu7x:2x2x1
jax: 0.10.0
libtpu: 0.0.40
codegen_flags: <defaults>
</compile_context>

<pallas_src>
import jax
import jax.numpy as jnp
from jax.experimental import pallas as pl
from jax.experimental.pallas import tpu as pltpu


def dqn_kernel(x_ref, w1_ref, b1_ref, w2_ref, b2_ref, w3_ref, b3_ref, out_ref):
    # Layer 1: K = n_observations (tiny); bf16 MXU matmul, f32 accumulate,
    # f32 bias + ReLU on the VPU.
    x = x_ref[...].astype(jnp.bfloat16)
    h1 = jnp.dot(x, w1_ref[...], preferred_element_type=jnp.float32)
    h1 = jnp.maximum(h1 + b1_ref[...], 0.0)
    # Layer 2: cast activations to bf16 for the MXU, accumulate in f32.
    h2 = jnp.dot(h1.astype(jnp.bfloat16), w2_ref[...],
                 preferred_element_type=jnp.float32)
    h2 = jnp.maximum(h2 + b2_ref[...], 0.0)
    # Layer 3: output padded to 128 lanes -> lane-dense (unmasked) bf16 store.
    out = jnp.dot(h2.astype(jnp.bfloat16), w3_ref[...],
                  preferred_element_type=jnp.float32)
    out_ref[...] = (out + b3_ref[...]).astype(out_ref.dtype)


def prepare_params(params):
    """One-time parameter prep (hoist out of the per-step hot path).

    Casts weights to bf16 for the MXU and zero-pads layer-3 weight/bias to a
    lane-dense 128-wide output. Re-run only when parameters change.
    """
    hidden = params["w1"].shape[1]
    n_actions = params["w3"].shape[1]
    n_pad = max(128, ((n_actions + 127) // 128) * 128)
    w3p = jnp.zeros((hidden, n_pad), jnp.bfloat16).at[:, :n_actions].set(
        params["w3"].astype(jnp.bfloat16))
    b3p = jnp.zeros((1, n_pad), jnp.float32).at[:, :n_actions].set(params["b3"])
    return dict(
        w1=params["w1"].astype(jnp.bfloat16), b1=params["b1"],
        w2=params["w2"].astype(jnp.bfloat16), b2=params["b2"],
        w3=w3p, b3=b3p,
    )


def _batch_tiling(B, *, max_tb=1024):
    """Pick (tile_rows, n_tiles). Tiles are multiples of 128 rows.

    Small batches -> a single tile (lowest per-step overhead). Larger batches
    -> at least 2 tiles so v7x can shard them across its 2 TensorCores, with
    tiles capped at max_tb rows (VMEM use stays ~1 MiB, far under any limit).
    """
    if B <= 128:
        return 128, 1
    n_tiles = max(2, pl.cdiv(B, max_tb))
    tb = ((pl.cdiv(B, n_tiles) + 127) // 128) * 128
    return tb, n_tiles


def dqn_forward(x, prepped, n_actions, *, max_tb=1024):
    """x: (B, n_observations) float32. prepped: output of prepare_params()."""
    B, n_obs = x.shape
    hidden = prepped["w1"].shape[1]
    n_pad = prepped["w3"].shape[1]

    tb, n_tiles = _batch_tiling(B, max_tb=max_tb)
    Bp = tb * n_tiles
    if Bp != B:
        x = jnp.pad(x, ((0, Bp - B), (0, 0)))

    # Weights/biases: constant block index across the grid -> DMA'd once,
    # VMEM-resident for all batch tiles.
    const = lambda arr: pl.BlockSpec(arr.shape, lambda i: (0,) * arr.ndim)

    flops = 2 * Bp * (n_obs * hidden + hidden * hidden + hidden * n_pad)
    bytes_accessed = (
        Bp * n_obs * 4                                              # x (f32)
        + 2 * (n_obs * hidden + hidden * hidden + hidden * n_pad)   # bf16 weights
        + 4 * (hidden + hidden + n_pad)                             # f32 biases
        + Bp * n_pad * 2                                            # bf16 output
    )

    out = pl.pallas_call(
        dqn_kernel,
        out_shape=jax.ShapeDtypeStruct((Bp, n_pad), jnp.bfloat16),
        grid=(n_tiles,),
        in_specs=[
            pl.BlockSpec((tb, n_obs), lambda i: (i, 0)),  # x: tiled over batch
            const(prepped["w1"]), const(prepped["b1"]),
            const(prepped["w2"]), const(prepped["b2"]),
            const(prepped["w3"]), const(prepped["b3"]),
        ],
        out_specs=pl.BlockSpec((tb, n_pad), lambda i: (i, 0)),
        compiler_params=pltpu.CompilerParams(
            dimension_semantics=("parallel",)),  # shards batch tiles on v7x's 2 TCs
        cost_estimate=pl.CostEstimate(
            flops=flops, bytes_accessed=bytes_accessed, transcendentals=0),
    )(x, prepped["w1"], prepped["b1"], prepped["w2"], prepped["b2"],
      prepped["w3"], prepped["b3"])

    # Kernel writeback stays bf16 (half the HBM store bytes); the returned
    # (B, n_actions) Q-values are cast back to f32 to match the PyTorch module.
    # TODO(synk): for pure action selection, fuse argmax/max over actions into
    # the kernel to drop the padded output writeback entirely.
    return out[:B, :n_actions].astype(jnp.float32)


def init_params(key, n_observations, n_actions):
    """Deterministic init mirroring nn.Linear default (uniform +-1/sqrt(fan_in))."""
    ks = jax.random.split(key, 6)

    def linear(kw, kb, fan_in, fan_out):
        bound = 1.0 / jnp.sqrt(fan_in)
        w = jax.random.uniform(kw, (fan_in, fan_out), jnp.float32, -bound, bound)
        b = jax.random.uniform(kb, (1, fan_out), jnp.float32, -bound, bound)
        return w, b

    w1, b1 = linear(ks[0], ks[1], n_observations, 128)
    w2, b2 = linear(ks[2], ks[3], 128, 128)
    w3, b3 = linear(ks[4], ks[5], 128, n_actions)
    return dict(w1=w1, b1=b1, w2=w2, b2=b2, w3=w3, b3=b3)


def dqn_reference(x, p):
    h1 = jnp.maximum(x @ p["w1"] + p["b1"], 0.0)
    h2 = jnp.maximum(h1 @ p["w2"] + p["b2"], 0.0)
    return h2 @ p["w3"] + p["b3"]


if __name__ == "__main__":
    key = jax.random.PRNGKey(0)
    k_params, k_x = jax.random.split(key)

    n_observations = 4   # e.g. CartPole observation dim
    n_actions = 2        # e.g. CartPole action dim
    batch = 256          # whole replay batch in one call (2 batch tiles of 128)

    params = init_params(k_params, n_observations, n_actions)
    prepped = prepare_params(params)   # param cast/pad hoisted out of the hot path

    x = jax.random.normal(k_x, (batch, n_observations), jnp.float32)

    out = dqn_forward(x, prepped, n_actions)
    out = jax.block_until_ready(out)

    ref = dqn_reference(x, params)
    assert out.shape == (batch, n_actions)
    # bf16 MXU operands + bf16 output storage (f32 accumulate) => compare
    # against the f32 reference with a bf16-appropriate tolerance.
    assert jnp.allclose(out, ref, atol=5e-2, rtol=5e-2), "mismatch vs reference"

    print("KERNEL_OK")
</pallas_src>

<mosaic_0001>
module attributes {stable_mosaic.version = 11 : i64} {
  func.func @dqn_kernel(%arg0: i32, %arg1: memref<128x4xf32, #tpu.memory_space<vmem>>, %arg2: memref<4x128xbf16, #tpu.memory_space<vmem>>, %arg3: memref<1x128xf32, #tpu.memory_space<vmem>>, %arg4: memref<128x128xbf16, #tpu.memory_space<vmem>>, %arg5: memref<1x128xf32, #tpu.memory_space<vmem>>, %arg6: memref<128x128xbf16, #tpu.memory_space<vmem>>, %arg7: memref<1x128xf32, #tpu.memory_space<vmem>>, %arg8: memref<128x128xbf16, #tpu.memory_space<vmem>>) attributes {dimension_semantics = [#tpu.dimension_semantics<parallel>], iteration_bounds = array<i64: 2>, scalar_prefetch = 0 : i64, scratch_operands = 0 : i64, tpu.core_type = #tpu.core_type<tc>, window_params = [{transform_indices = @transform_0, window_bounds = array<i64: 128, 4>}, {pipeline_mode = #tpu.pipeline_mode<synchronous>, transform_indices = @transform_1, window_bounds = array<i64: 4, 128>}, {pipeline_mode = #tpu.pipeline_mode<synchronous>, transform_indices = @transform_2, window_bounds = array<i64: 1, 128>}, {pipeline_mode = #tpu.pipeline_mode<synchronous>, transform_indices = @transform_3, window_bounds = array<i64: 128, 128>}, {pipeline_mode = #tpu.pipeline_mode<synchronous>, transform_indices = @transform_4, window_bounds = array<i64: 1, 128>}, {pipeline_mode = #tpu.pipeline_mode<synchronous>, transform_indices = @transform_5, window_bounds = array<i64: 128, 128>}, {pipeline_mode = #tpu.pipeline_mode<synchronous>, transform_indices = @transform_6, window_bounds = array<i64: 1, 128>}, {transform_indices = @transform_7, window_bounds = array<i64: 128, 128>}]} {
    %c0 = arith.constant 0 : index
    %c0_0 = arith.constant 0 : index
    %0 = vector.load %arg1[%c0, %c0_0] : memref<128x4xf32, #tpu.memory_space<vmem>>, vector<128x4xf32>
    %1 = arith.truncf %0 : vector<128x4xf32> to vector<128x4xbf16>
    %c0_1 = arith.constant 0 : index
    %c0_2 = arith.constant 0 : index
    %2 = vector.load %arg2[%c0_1, %c0_2] : memref<4x128xbf16, #tpu.memory_space<vmem>>, vector<4x128xbf16>
    %cst = arith.constant dense<0.000000e+00> : vector<128x128xf32>
    %3 = tpu.matmul %1, %2, %cst {dimension_numbers = #tpu.dot_dimension_numbers<[1], [0], [0], [1], [0, 0, 1, 1], [], []>} : vector<128x4xbf16>, vector<4x128xbf16>, vector<128x128xf32> -> vector<128x128xf32>
    %c0_3 = arith.constant 0 : index
    %c0_4 = arith.constant 0 : index
    %4 = vector.load %arg3[%c0_3, %c0_4] : memref<1x128xf32, #tpu.memory_space<vmem>>, vector<1x128xf32>
    %5 = vector.broadcast %4 : vector<1x128xf32> to vector<128x128xf32>
    %6 = arith.addf %3, %5 : vector<128x128xf32>
    %cst_5 = arith.constant 0.000000e+00 : f32
    %7 = vector.broadcast %cst_5 : f32 to vector<128x128xf32>
    %8 = arith.maximumf %6, %7 : vector<128x128xf32>
    %9 = arith.truncf %8 : vector<128x128xf32> to vector<128x128xbf16>
    %c0_6 = arith.constant 0 : index
    %c0_7 = arith.constant 0 : index
    %10 = vector.load %arg4[%c0_6, %c0_7] : memref<128x128xbf16, #tpu.memory_space<vmem>>, vector<128x128xbf16>
    %cst_8 = arith.constant dense<0.000000e+00> : vector<128x128xf32>
    %11 = tpu.matmul %9, %10, %cst_8 {dimension_numbers = #tpu.dot_dimension_numbers<[1], [0], [0], [1], [0, 0, 1, 1], [], []>} : vector<128x128xbf16>, vector<128x128xbf16>, vector<128x128xf32> -> vector<128x128xf32>
    %c0_9 = arith.constant 0 : index
    %c0_10 = arith.constant 0 : index
    %12 = vector.load %arg5[%c0_9, %c0_10] : memref<1x128xf32, #tpu.memory_space<vmem>>, vector<1x128xf32>
    %13 = vector.broadcast %12 : vector<1x128xf32> to vector<128x128xf32>
    %14 = arith.addf %11, %13 : vector<128x128xf32>
    %cst_11 = arith.constant 0.000000e+00 : f32
    %15 = vector.broadcast %cst_11 : f32 to vector<128x128xf32>
    %16 = arith.maximumf %14, %15 : vector<128x128xf32>
    %17 = arith.truncf %16 : vector<128x128xf32> to vector<128x128xbf16>
    %c0_12 = arith.constant 0 : index
    %c0_13 = arith.constant 0 : index
    %18 = vector.load %arg6[%c0_12, %c0_13] : memref<128x128xbf16, #tpu.memory_space<vmem>>, vector<128x128xbf16>
    %cst_14 = arith.constant dense<0.000000e+00> : vector<128x128xf32>
    %19 = tpu.matmul %17, %18, %cst_14 {dimension_numbers = #tpu.dot_dimension_numbers<[1], [0], [0], [1], [0, 0, 1, 1], [], []>} : vector<128x128xbf16>, vector<128x128xbf16>, vector<128x128xf32> -> vector<128x128xf32>
    %c0_15 = arith.constant 0 : index
    %c0_16 = arith.constant 0 : index
    %20 = vector.load %arg7[%c0_15, %c0_16] : memref<1x128xf32, #tpu.memory_space<vmem>>, vector<1x128xf32>
    %21 = vector.broadcast %20 : vector<1x128xf32> to vector<128x128xf32>
    %22 = arith.addf %19, %21 : vector<128x128xf32>
    %23 = arith.truncf %22 : vector<128x128xf32> to vector<128x128xbf16>
    %c0_17 = arith.constant 0 : index
    %c0_18 = arith.constant 0 : index
    %24 = vector.load %arg8[%c0_17, %c0_18] : memref<128x128xbf16, #tpu.memory_space<vmem>>, vector<128x128xbf16>
    tpu.vector_store %arg8[%c0_17, %c0_18], %23 {strides = array<i32>} : memref<128x128xbf16, #tpu.memory_space<vmem>>, vector<128x128xbf16>,
    return
  }
  func.func @transform_0(%arg0: i32) -> (i32, i32) {
    %c0_i32 = arith.constant 0 : i32
    %c0_i32_0 = arith.constant 0 : i32
    return %arg0, %c0_i32 : i32, i32
  }
  func.func @transform_1(%arg0: i32) -> (i32, i32) {
    %c0_i32 = arith.constant 0 : i32
    %c0_i32_0 = arith.constant 0 : i32
    %c0_i32_1 = arith.constant 0 : i32
    return %c0_i32, %c0_i32_0 : i32, i32
  }
  func.func @transform_2(%arg0: i32) -> (i32, i32) {
    %c0_i32 = arith.constant 0 : i32
    %c0_i32_0 = arith.constant 0 : i32
    %c0_i32_1 = arith.constant 0 : i32
    return %c0_i32, %c0_i32_0 : i32, i32
  }
  func.func @transform_3(%arg0: i32) -> (i32, i32) {
    %c0_i32 = arith.constant 0 : i32
    %c0_i32_0 = arith.constant 0 : i32
    %c0_i32_1 = arith.constant 0 : i32
    return %c0_i32, %c0_i32_0 : i32, i32
  }
  func.func @transform_4(%arg0: i32) -> (i32, i32) {
    %c0_i32 = arith.constant 0 : i32
    %c0_i32_0 = arith.constant 0 : i32
    %c0_i32_1 = arith.constant 0 : i32
    return %c0_i32, %c0_i32_0 : i32, i32
  }
  func.func @transform_5(%arg0: i32) -> (i32, i32) {
    %c0_i32 = arith.constant 0 : i32
    %c0_i32_0 = arith.constant 0 : i32
    %c0_i32_1 = arith.constant 0 : i32
    return %c0_i32, %c0_i32_0 : i32, i32
  }
  func.func @transform_6(%arg0: i32) -> (i32, i32) {
    %c0_i32 = arith.constant 0 : i32
    %c0_i32_0 = arith.constant 0 : i32
    %c0_i32_1 = arith.constant 0 : i32
    return %c0_i32, %c0_i32_0 : i32, i32
  }
  func.func @transform_7(%arg0: i32) -> (i32, i32) {
    %c0_i32 = arith.constant 0 : i32
    %c0_i32_0 = arith.constant 0 : i32
    return %arg0, %c0_i32 : i32, i32
  }
}

</mosaic_0001>

<llo_original>
// kernel: tpu_custom_call.1
$region0: #{tpu_custom_call.1}
  #allocation0 [shape = 'u32[]', space=smem, size = 0x4, offset = 0x4, fixed_abs, tag = 'smem constant byte address 0x4 - core index']
  #allocation1 [shape = 'u32[144,128]{1,0:T(1,128)}', space=vmem, size = 0x12000, scoped, tag = 'internal scratch']
  %s0 = inlined_call_operand.vmem [shape: f32[256,4], index: 0, kind: input, shape index: {}]
  %s1 = inlined_call_operand.vmem [shape: bf16[4,128], index: 1, kind: input, shape index: {}]
  %s2 = inlined_call_operand.vmem [shape: f32[1,128], index: 2, kind: input, shape index: {}]
  %s3 = inlined_call_operand.vmem [shape: bf16[128,128], index: 3, kind: input, shape index: {}]
  %s4 = inlined_call_operand.vmem [shape: f32[1,128], index: 4, kind: input, shape index: {}]
  %s5 = inlined_call_operand.vmem [shape: bf16[128,128], index: 5, kind: input, shape index: {}]
  %s6 = inlined_call_operand.vmem [shape: f32[1,128], index: 6, kind: input, shape index: {}]
  %s7 = inlined_call_operand.hbm [shape: bf16[256,128], index: 7, kind: output, shape index: {}]
  %s8 = sld [smem:[#allocation0]]
  $region61: #{tpu_custom_call.1} parent=0
    _
  %s10 = ssub.s32 1, %s8
  %s11 = scalar_select 0, %s10, %s8
  $region1: #{tpu_custom_call.1} parent=0
    #allocation2 [shape = 'u8[65536]{0}', space=vmem, size = 0x10000, scoped, tag = 'output window, operand 0']
    #allocation3 [shape = 's32[2]{0}', space=sflag, size = 0x8, scoped, tag = 'scoped memory for tpu_custom_call.1']
    %12 = vsyncpa [#allocation3], 0
    %s13 = scalar_lea.sflag [#allocation3], 1
    %14 = vsyncpa %s13, 0
    loop: start=0, step=1, limit=4
    $region2: #{tpu_custom_call.1} parent=1 // loop_pre_header
      _
    $region3: #{tpu_custom_call.1} parent=1 // loop_header
      %s16 = sphi 0, %s20
      %p17 = scmp.ge.s32.totalorder %s16, 4
      %s26 = sphi 0, %s28
      %s29 = sphi 0, %s26
      %s30 = sphi 0, %s29
      %s46 = sphi 0, %s30
      %s50 = sphi 0, %s50
      %s52 = sphi 0, %s50
      %s53 = sphi 0, %s52
      %s67 = sphi 0, %s53
      %s71 = sphi 0, %s71
      %s73 = sphi 0, %s71
      %s74 = sphi 0, %s73
      %s88 = sphi 0, %s74
      %s92 = sphi 0, %s92
      %s94 = sphi 0, %s92
      %s95 = sphi 0, %s94
      %s109 = sphi 0, %s95
      %s113 = sphi 0, %s113
      %s115 = sphi 0, %s113
      %s116 = sphi 0, %s115
      %s130 = sphi 0, %s116
      %s134 = sphi 0, %s134
      %s136 = sphi 0, %s134
      %s137 = sphi 0, %s136
      %s151 = sphi 0, %s137
      %s155 = sphi 0, %s155
      %s157 = sphi 0, %s155
      %s158 = sphi 0, %s157
      %s172 = sphi 0, %s158
      %s178 = sphi 0, %s180
      %s181 = sphi 0, %s178
      %s182 = sphi 0, %s181
      %s198 = sphi 0, %s182
    $region4: #{tpu_custom_call.1} parent=1 // loop_header_branch
      %19 = sbr.rel (%p17) target = $region8
    $region5: #{tpu_custom_call.1} parent=1 // loop_body
      %s21 = ssub.s32 %s16, 1
      %s22 = ssub.s32 %s16, 2
      %s23 = sadd.s32 %s16, 1
      %s24 = ssub.s32 %s16, %s23
      %p25 = scmp.eq.s32.totalorder %s24, 0
      %s27 = sadd.s32 %s26, 1
      %s28 = scalar_select %p25, %s26, %s27
      %p31 = pneg %p25
      %p32 = scmp.eq.s32.totalorder %s16, 1
      %p33 = por %p31, %p32
      %p34 = scmp.ne.s32.totalorder %s26, %s29
      %p35 = scmp.eq.s32.totalorder %s16, 0
      %p36 = por %p34, %p35
      %p37 = scmp.ne.s32.totalorder %s26, %s29
      %p38 = scmp.eq.s32.totalorder %s21, 1
      %p39 = por %p37, %p38
      %p40 = scmp.ne.s32.totalorder %s29, %s30
      %p41 = scmp.eq.s32.totalorder %s21, 0
      %p42 = por %p40, %p41
      %p43 = scmp.ne.s32.totalorder %s29, %s30
      %p44 = scmp.eq.s32.totalorder %s22, 1
      %p45 = por %p43, %p44
      %p47 = scmp.ne.s32.totalorder %s30, %s46
      %p48 = scmp.eq.s32.totalorder %s22, 0
      %p49 = por %p47, %p48
      %s51 = sadd.s32 %s50, 1
      %p54 = scmp.eq.s32.totalorder %s16, 1
      %p55 = scmp.ne.s32.totalorder %s50, %s52
      %p56 = scmp.eq.s32.totalorder %s16, 0
      %p57 = por %p55, %p56
      %p58 = scmp.ne.s32.totalorder %s50, %s52
      %p59 = scmp.eq.s32.totalorder %s21, 1
      %p60 = por %p58, %p59
      %p61 = scmp.ne.s32.totalorder %s52, %s53
      %p62 = scmp.eq.s32.totalorder %s21, 0
      %p63 = por %p61, %p62
      %p64 = scmp.ne.s32.totalorder %s52, %s53
      %p65 = scmp.eq.s32.totalorder %s22, 1
      %p66 = por %p64, %p65
      %p68 = scmp.ne.s32.totalorder %s53, %s67
      %p69 = scmp.eq.s32.totalorder %s22, 0
      %p70 = por %p68, %p69
      %s72 = sadd.s32 %s71, 1
      %p75 = scmp.eq.s32.totalorder %s16, 1
      %p76 = scmp.ne.s32.totalorder %s71, %s73
      %p77 = scmp.eq.s32.totalorder %s16, 0
      %p78 = por %p76, %p77
      %p79 = scmp.ne.s32.totalorder %s71, %s73
      %p80 = scmp.eq.s32.totalorder %s21, 1
      %p81 = por %p79, %p80
      %p82 = scmp.ne.s32.totalorder %s73, %s74
      %p83 = scmp.eq.s32.totalorder %s21, 0
      %p84 = por %p82, %p83
      %p85 = scmp.ne.s32.totalorder %s73, %s74
      %p86 = scmp.eq.s32.totalorder %s22, 1
      %p87 = por %p85, %p86
      %p89 = scmp.ne.s32.totalorder %s74, %s88
      %p90 = scmp.eq.s32.totalorder %s22, 0
      %p91 = por %p89, %p90
      %s93 = sadd.s32 %s92, 1
      %p96 = scmp.eq.s32.totalorder %s16, 1
      %p97 = scmp.ne.s32.totalorder %s92, %s94
      %p98 = scmp.eq.s32.totalorder %s16, 0
      %p99 = por %p97, %p98
      %p100 = scmp.ne.s32.totalorder %s92, %s94
      %p101 = scmp.eq.s32.totalorder %s21, 1
      %p102 = por %p100, %p101
      %p103 = scmp.ne.s32.totalorder %s94, %s95
      %p104 = scmp.eq.s32.totalorder %s21, 0
      %p105 = por %p103, %p104
      %p106 = scmp.ne.s32.totalorder %s94, %s95
      %p107 = scmp.eq.s32.totalorder %s22, 1
      %p108 = por %p106, %p107
      %p110 = scmp.ne.s32.totalorder %s95, %s109
      %p111 = scmp.eq.s32.totalorder %s22, 0
      %p112 = por %p110, %p111
      %s114 = sadd.s32 %s113, 1
      %p117 = scmp.eq.s32.totalorder %s16, 1
      %p118 = scmp.ne.s32.totalorder %s113, %s115
      %p119 = scmp.eq.s32.totalorder %s16, 0
      %p120 = por %p118, %p119
      %p121 = scmp.ne.s32.totalorder %s113, %s115
      %p122 = scmp.eq.s32.totalorder %s21, 1
      %p123 = por %p121, %p122
      %p124 = scmp.ne.s32.totalorder %s115, %s116
      %p125 = scmp.eq.s32.totalorder %s21, 0
      %p126 = por %p124, %p125
      %p127 = scmp.ne.s32.totalorder %s115, %s116
      %p128 = scmp.eq.s32.totalorder %s22, 1
      %p129 = por %p127, %p128
      %p131 = scmp.ne.s32.totalorder %s116, %s130
      %p132 = scmp.eq.s32.totalorder %s22, 0
      %p133 = por %p131, %p132
      %s135 = sadd.s32 %s134, 1
      %p138 = scmp.eq.s32.totalorder %s16, 1
      %p139 = scmp.ne.s32.totalorder %s134, %s136
      %p140 = scmp.eq.s32.totalorder %s16, 0
      %p141 = por %p139, %p140
      %p142 = scmp.ne.s32.totalorder %s134, %s136
      %p143 = scmp.eq.s32.totalorder %s21, 1
      %p144 = por %p142, %p143
      %p145 = scmp.ne.s32.totalorder %s136, %s137
      %p146 = scmp.eq.s32.totalorder %s21, 0
      %p147 = por %p145, %p146
      %p148 = scmp.ne.s32.totalorder %s136, %s137
      %p149 = scmp.eq.s32.totalorder %s22, 1
      %p150 = por %p148, %p149
      %p152 = scmp.ne.s32.totalorder %s137, %s151
      %p153 = scmp.eq.s32.totalorder %s22, 0
      %p154 = por %p152, %p153
      %s156 = sadd.s32 %s155, 1
      %p159 = scmp.eq.s32.totalorder %s16, 1
      %p160 = scmp.ne.s32.totalorder %s155, %s157
      %p161 = scmp.eq.s32.totalorder %s16, 0
      %p162 = por %p160, %p161
      %p163 = scmp.ne.s32.totalorder %s155, %s157
      %p164 = scmp.eq.s32.totalorder %s21, 1
      %p165 = por %p163, %p164
      %p166 = scmp.ne.s32.totalorder %s157, %s158
      %p167 = scmp.eq.s32.totalorder %s21, 0
      %p168 = por %p166, %p167
      %p169 = scmp.ne.s32.totalorder %s157, %s158
      %p170 = scmp.eq.s32.totalorder %s22, 1
      %p171 = por %p169, %p170
      %p173 = scmp.ne.s32.totalorder %s158, %s172
      %p174 = scmp.eq.s32.totalorder %s22, 0
      %p175 = por %p173, %p174
      %s176 = ssub.s32 %s16, %s23
      %p177 = scmp.eq.s32.totalorder %s176, 0
      %s179 = sadd.s32 %s178, 1
      %s180 = scalar_select %p177, %s178, %s179
      %p183 = pneg %p177
      %p184 = scmp.eq.s32.totalorder %s16, 1
      %p185 = por %p183, %p184
      %p186 = scmp.ne.s32.totalorder %s178, %s181
      %p187 = scmp.eq.s32.totalorder %s16, 0
      %p188 = por %p186, %p187
      %p189 = scmp.ne.s32.totalorder %s178, %s181
      %p190 = scmp.eq.s32.totalorder %s21, 1
      %p191 = por %p189, %p190
      %p192 = scmp.ne.s32.totalorder %s181, %s182
      %p193 = scmp.eq.s32.totalorder %s21, 0
      %p194 = por %p192, %p193
      %p195 = scmp.ne.s32.totalorder %s181, %s182
      %p196 = scmp.eq.s32.totalorder %s22, 1
      %p197 = por %p195, %p196
      %p199 = scmp.ne.s32.totalorder %s182, %s198
      %p200 = scmp.eq.s32.totalorder %s22, 0
      %p201 = por %p199, %p200
      %p202 = scmp.le.s32.totalorder 1, %s16
      %p203 = scmp.lt.s32.totalorder %s16, 3
      %p204 = pnand %p202, %p203
      %p205 = pneg %p204
      // Predicated region
      $region9: #{tpu_custom_call.1} parent=5 // pred_check
        _
      $region10: #{tpu_custom_call.1} parent=5 // pred_check_branch
        %207 = sbr.rel (%p204) target = $region12
      $region11: #{tpu_custom_call.1} parent=5 // pred_region
        %s208 = ssub.s32 %s16, 1
        // Predicated region
        $region13: #{tpu_custom_call.1} parent=11 // pred_check
          %p209 = pneg %p63
        $region14: #{tpu_custom_call.1} parent=11 // pred_check_branch
          %211 = sbr.rel (%p209) target = $region16
        $region15: #{tpu_custom_call.1} parent=11 // pred_region
          _
        $region16: #{tpu_custom_call.1} parent=11 // pred_fallthru
          _
        // Predicated region
        $region17: #{tpu_custom_call.1} parent=11 // pred_check
          %p212 = pneg %p84
        $region18: #{tpu_custom_call.1} parent=11 // pred_check_branch
          %214 = sbr.rel (%p212) target = $region20
        $region19: #{tpu_custom_call.1} parent=11 // pred_region
          _
        $region20: #{tpu_custom_call.1} parent=11 // pred_fallthru
          _
        // Predicated region
        $region21: #{tpu_custom_call.1} parent=11 // pred_check
          %p215 = pneg %p105
        $region22: #{tpu_custom_call.1} parent=11 // pred_check_branch
          %217 = sbr.rel (%p215) target = $region24
        $region23: #{tpu_custom_call.1} parent=11 // pred_region
          _
        $region24: #{tpu_custom_call.1} parent=11 // pred_fallthru
          _
        // Predicated region
        $region25: #{tpu_custom_call.1} parent=11 // pred_check
          %p218 = pneg %p126
        $region26: #{tpu_custom_call.1} parent=11 // pred_check_branch
          %220 = sbr.rel (%p218) target = $region28
        $region27: #{tpu_custom_call.1} parent=11 // pred_region
          _
        $region28: #{tpu_custom_call.1} parent=11 // pred_fallthru
          _
        // Predicated region
        $region29: #{tpu_custom_call.1} parent=11 // pred_check
          %p221 = pneg %p147
        $region30: #{tpu_custom_call.1} parent=11 // pred_check_branch
          %223 = sbr.rel (%p221) target = $region32
        $region31: #{tpu_custom_call.1} parent=11 // pred_region
          _
        $region32: #{tpu_custom_call.1} parent=11 // pred_fallthru
          _
        // Predicated region
        $region33: #{tpu_custom_call.1} parent=11 // pred_check
          %p224 = pneg %p168
        $region34: #{tpu_custom_call.1} parent=11 // pred_check_branch
          %226 = sbr.rel (%p224) target = $region36
        $region35: #{tpu_custom_call.1} parent=11 // pred_region
          _
        $region36: #{tpu_custom_call.1} parent=11 // pred_fallthru
          _
      $region12: #{tpu_custom_call.1} parent=5 // pred_fallthru
        _
      %p227 = scmp.lt.s32.totalorder %s16, 2
      // Predicated region
      $region37: #{tpu_custom_call.1} parent=5 // pred_check
        %p228 = pneg %p227
      $region38: #{tpu_custom_call.1} parent=5 // pred_check_branch
        %230 = sbr.rel (%p228) target = $region40
      $region39: #{tpu_custom_call.1} parent=5 // pred_region
        // Predicated region
        $region41: #{tpu_custom_call.1} parent=39 // pred_check
          %p231 = pneg %p36
        $region42: #{tpu_custom_call.1} parent=39 // pred_check_branch
          %233 = sbr.rel (%p231) target = $region44
        $region43: #{tpu_custom_call.1} parent=39 // pred_region
          %s234 = smul.u32 16, %s16
          %p235 = scmp.lt.s32.totalorder %s234, 31
          %s236 = scalar_select %p235, %s234, 31
          %s237 = smul.addr %s236, 8
          %s238 = scalar_lea.vmem %s0, %s237
          %s239 = smul.u32 16, %s16
        $region44: #{tpu_custom_call.1} parent=39 // pred_fallthru
          _
      $region40: #{tpu_custom_call.1} parent=5 // pred_fallthru
        _
      %p240 = scmp.le.s32.totalorder 1, %s16
      %p241 = scmp.lt.s32.totalorder %s16, 3
      %p242 = pnand %p240, %p241
      %p243 = pneg %p242
      // Predicated region
      $region45: #{tpu_custom_call.1} parent=5 // pred_check
        _
      $region46: #{tpu_custom_call.1} parent=5 // pred_check_branch
        %245 = sbr.rel (%p242) target = $region48
      $region47: #{tpu_custom_call.1} parent=5 // pred_region
        %s246 = ssub.s32 %s16, 1
        %s247 = smul.u32 16, %s21
        %p248 = scmp.lt.s32.totalorder %s247, 31
        %s249 = scalar_select %p248, %s247, 31
        %s250 = smul.addr %s249, 8
        %s251 = scalar_lea.vmem %s0, %s250
        %p252 = pneg %p42
        %p253 = pneg %p39
        %p254 = pneg %p63
        %p255 = pneg %p60
        %p256 = pneg %p84
        %p257 = pneg %p81
        %p258 = pneg %p105
        %p259 = pneg %p102
        %p260 = pneg %p126
        %p261 = pneg %p123
        %p262 = pneg %p147
        %p263 = pneg %p144
        %p264 = pneg %p168
        %p265 = pneg %p165
        %p266 = pneg %p194
        %p267 = pneg %p191
        %s268 = sand.u32 %s181, 1
        %s269 = scalar_lea.sflag [#allocation3], %s268
        %s270 = sand.u32 %s181, 1
        %s271 = smul.addr %s270, 64
        %s272 = scalar_lea.vmem [#allocation2], %s271
        %s273 = smul.u32 16, %s21
        %p274 = scmp.lt.s32.totalorder %s273, 31
        %s275 = scalar_select %p274, %s273, 31
        %s276 = smul.addr %s275, 8
        %s277 = scalar_lea.vmem %s0, %s276
        %s278 = smul.u32 16, %s21
        %s279 = smul.u32 16, %s21
        %v281 = vld [vmem:[%s277] sm:$0xff]
        %v282 = vld [vmem:[%s277 + $0x8] sm:$0xff]
        %v283 = vld [vmem:[%s277 + $0x10] sm:$0xff]
        %v284 = vld [vmem:[%s277 + $0x18] sm:$0xff]
        %v285 = vld [vmem:[%s277 + $0x20] sm:$0xff]
        %v286 = vld [vmem:[%s277 + $0x28] sm:$0xff]
        %v287 = vld [vmem:[%s277 + $0x30] sm:$0xff]
        %v288 = vld [vmem:[%s277 + $0x38] sm:$0xff]
        %v289 = vld [vmem:[%s277 + $0x40] sm:$0xff]
        %v290 = vld [vmem:[%s277 + $0x48] sm:$0xff]
        %v291 = vld [vmem:[%s277 + $0x50] sm:$0xff]
        %v292 = vld [vmem:[%s277 + $0x58] sm:$0xff]
        %v293 = vld [vmem:[%s277 + $0x60] sm:$0xff]
        %v294 = vld [vmem:[%s277 + $0x68] sm:$0xff]
        %v295 = vld [vmem:[%s277 + $0x70] sm:$0xff]
        %v296 = vld [vmem:[%s277 + $0x78] sm:$0xff]
        %v297 = vpack.c.bf16 %v282, %v281
        %v298 = vpack.c.bf16 %v284, %v283
        %v299 = vpack.c.bf16 %v286, %v285
        %v300 = vpack.c.bf16 %v288, %v287
        %v301 = vpack.c.bf16 %v290, %v289
        %v302 = vpack.c.bf16 %v292, %v291
        %v303 = vpack.c.bf16 %v294, %v293
        %v304 = vpack.c.bf16 %v296, %v295
        %v305 = vld [vmem:[%s1] sm:$0x3]
        %v306 = vld [vmem:[%s2] sm:$0x1]
        %v308 = vlaneseq
        %v309 = vshrl.u32 %v308, 7
        %v310 = vsub.s32 0, %v309
        %v311 = vrot.slane %v306, %v310
        %vm313 = vcmask 31744
        %v315 = vsel %vm313, %v297, 0
        %v318 = vsel %vm313, %v298, 0
        %v321 = vsel %vm313, %v299, 0
        %v324 = vsel %vm313, %v300, 0
        %v327 = vsel %vm313, %v301, 0
        %v330 = vsel %vm313, %v302, 0
        %v333 = vsel %vm313, %v303, 0
        %v336 = vsel %vm313, %v304, 0
        %vm338 = vcmask 1041408
        %v340 = vsel %vm338, %v305, 0
        %342 = vmatprep.subr.bf16.mxu0 0
        %343 = vmatpush1.bf16.msra.mxu0 %v340
        %344 = vmatprep.subr.bf16.mxu0 0
        %345 = vmatpush1.bf16.msra.mxu0 0
        %346 = vmatprep.subr.bf16.mxu0 0
        %347 = vmatpush1.bf16.msra.mxu0 0
        %348 = vmatprep.subr.bf16.mxu0 0
        %349 = vmatpush1.bf16.msra.mxu0 0
        %350 = vmatprep.subr.bf16.mxu0 0
        %351 = vmatpush1.bf16.msra.mxu0 0
        %352 = vmatprep.subr.bf16.mxu0 0
        %353 = vmatpush1.bf16.msra.mxu0 0
        %354 = vmatprep.subr.bf16.mxu0 0
        %355 = vmatpush1.bf16.msra.mxu0 0
        %356 = vmatprep.subr.bf16.mxu0 0
        %357 = vmatpush1.bf16.msra.mxu0 0
        %358 = vmatprep.subr.bf16.mxu0 0
        %359 = vmatpush1.bf16.msra.mxu0 0
        %360 = vmatprep.subr.bf16.mxu0 0
        %361 = vmatpush1.bf16.msra.mxu0 0
        %362 = vmatprep.subr.bf16.mxu0 0
        %363 = vmatpush1.bf16.msra.mxu0 0
        %364 = vmatprep.subr.bf16.mxu0 0
        %365 = vmatpush1.bf16.msra.mxu0 0
        %366 = vmatprep.subr.bf16.mxu0 0
        %367 = vmatpush1.bf16.msra.mxu0 0
        %368 = vmatprep.subr.bf16.mxu0 0
        %369 = vmatpush1.bf16.msra.mxu0 0
        %370 = vmatprep.subr.bf16.mxu0 0
        %371 = vmatpush1.bf16.msra.mxu0 0
        %372 = vmatprep.subr.bf16.mxu0 0
        %373 = vmatpush1.bf16.msra.mxu0 0
        %374 = vmatprep.mubr.bf16.mxu0 0
        %375 = vmatmul.mubr.bf16.gmra.mrb[0].mxu0 %v315
        %v376 = vpop.f32.mrb[0].mxu0
        %v377 = vadd.f32 %v311, %v376
        %v378 = vpop.f32.mrb[0].mxu0
        %v379 = vpop.f32.mrb[0].mxu0
        %v380 = vadd.f32 %v311, %v379
        %v381 = vpop.f32.mrb[0].mxu0
        %382 = vmatprep.mubr.bf16.mxu0 0
        %383 = vmatmul.mubr.bf16.gmra.mrb[0].mxu0 %v318
        %v384 = vpop.f32.mrb[0].mxu0
        %v385 = vadd.f32 %v311, %v384
        %v386 = vpop.f32.mrb[0].mxu0
        %v387 = vpop.f32.mrb[0].mxu0
        %v388 = vadd.f32 %v311, %v387
        %v389 = vpop.f32.mrb[0].mxu0
        %390 = vmatprep.mubr.bf16.mxu0 0
        %391 = vmatmul.mubr.bf16.gmra.mrb[0].mxu0 %v321
        %v392 = vpop.f32.mrb[0].mxu0
        %v393 = vadd.f32 %v311, %v392
        %v394 = vpop.f32.mrb[0].mxu0
        %v395 = vpop.f32.mrb[0].mxu0
        %v396 = vadd.f32 %v311, %v395
        %v397 = vpop.f32.mrb[0].mxu0
        %398 = vmatprep.mubr.bf16.mxu0 0
        %399 = vmatmul.mubr.bf16.gmra.mrb[0].mxu0 %v324
        %v400 = vpop.f32.mrb[0].mxu0
        %v401 = vadd.f32 %v311, %v400
        %v402 = vpop.f32.mrb[0].mxu0
        %v403 = vpop.f32.mrb[0].mxu0
        %v404 = vadd.f32 %v311, %v403
        %v405 = vpop.f32.mrb[0].mxu0
        %406 = vmatprep.mubr.bf16.mxu0 0
        %407 = vmatmul.mubr.bf16.gmra.mrb[0].mxu0 %v327
        %v408 = vpop.f32.mrb[0].mxu0
        %v409 = vadd.f32 %v311, %v408
        %v410 = vpop.f32.mrb[0].mxu0
        %v411 = vpop.f32.mrb[0].mxu0
        %v412 = vadd.f32 %v311, %v411
        %v413 = vpop.f32.mrb[0].mxu0
        %414 = vmatprep.mubr.bf16.mxu0 0
        %415 = vmatmul.mubr.bf16.gmra.mrb[0].mxu0 %v330
        %v416 = vpop.f32.mrb[0].mxu0
        %v417 = vadd.f32 %v311, %v416
        %v418 = vpop.f32.mrb[0].mxu0
        %v419 = vpop.f32.mrb[0].mxu0
        %v420 = vadd.f32 %v311, %v419
        %v421 = vpop.f32.mrb[0].mxu0
        %422 = vmatprep.mubr.bf16.mxu0 0
        %423 = vmatmul.mubr.bf16.gmra.mrb[0].mxu0 %v333
        %v424 = vpop.f32.mrb[0].mxu0
        %v425 = vadd.f32 %v311, %v424
        %v426 = vpop.f32.mrb[0].mxu0
        %v427 = vpop.f32.mrb[0].mxu0
        %v428 = vadd.f32 %v311, %v427
        %v429 = vpop.f32.mrb[0].mxu0
        %430 = vmatprep.mubr.bf16.mxu0 0
        %431 = vmatmul.mubr.bf16.gmra.mrb[0].mxu0 %v336
        %v432 = vpop.f32.mrb[0].mxu0
        %v433 = vadd.f32 %v311, %v432
        %v434 = vpop.f32.mrb[0].mxu0
        %v435 = vpop.f32.mrb[0].mxu0
        %v436 = vadd.f32 %v311, %v435
        %v437 = vpop.f32.mrb[0].mxu0
        %438 = vdwg.mxu0
        %v439 = vmax.f32 %v377, 0.0
        %v440 = vmax.f32 %v380, 0.0
        %v441 = vmax.f32 %v385, 0.0
        %v442 = vmax.f32 %v388, 0.0
        %v443 = vmax.f32 %v393, 0.0
        %v444 = vmax.f32 %v396, 0.0
        %v445 = vmax.f32 %v401, 0.0
        %v446 = vmax.f32 %v404, 0.0
        %v447 = vmax.f32 %v409, 0.0
        %v448 = vmax.f32 %v412, 0.0
        %v449 = vmax.f32 %v417, 0.0
        %v450 = vmax.f32 %v420, 0.0
        %v451 = vmax.f32 %v425, 0.0
        %v452 = vmax.f32 %v428, 0.0
        %v453 = vmax.f32 %v433, 0.0
        %v454 = vmax.f32 %v436, 0.0
        %v455 = vpack.c.bf16 %v440, %v439
        %v456 = vpack.c.bf16 %v442, %v441
        %v457 = vpack.c.bf16 %v444, %v443
        %v458 = vpack.c.bf16 %v446, %v445
        %v459 = vpack.c.bf16 %v448, %v447
        %v460 = vpack.c.bf16 %v450, %v449
        %v461 = vpack.c.bf16 %v452, %v451
        %v462 = vpack.c.bf16 %v454, %v453
        %v463 = vld [vmem:[%s3] sm:$0xf]
        %v464 = vld [vmem:[%s3 + $0x4] sm:$0xf]
        %v465 = vld [vmem:[%s3 + $0x8] sm:$0xf]
        %v466 = vld [vmem:[%s3 + $0xc] sm:$0xf]
        %v467 = vld [vmem:[%s3 + $0x10] sm:$0xf]
        %v468 = vld [vmem:[%s3 + $0x14] sm:$0xf]
        %v469 = vld [vmem:[%s3 + $0x18] sm:$0xf]
        %v470 = vld [vmem:[%s3 + $0x1c] sm:$0xf]
        %v471 = vld [vmem:[%s3 + $0x20] sm:$0xf]
        %v472 = vld [vmem:[%s3 + $0x24] sm:$0xf]
        %v473 = vld [vmem:[%s3 + $0x28] sm:$0xf]
        %v474 = vld [vmem:[%s3 + $0x2c] sm:$0xf]
        %v475 = vld [vmem:[%s3 + $0x30] sm:$0xf]
        %v476 = vld [vmem:[%s3 + $0x34] sm:$0xf]
        %v477 = vld [vmem:[%s3 + $0x38] sm:$0xf]
        %v478 = vld [vmem:[%s3 + $0x3c] sm:$0xf]
        %v479 = vld [vmem:[%s4] sm:$0x1]
        %v481 = vlaneseq
        %v482 = vshrl.u32 %v481, 7
        %v483 = vsub.s32 0, %v482
        %v484 = vrot.slane %v479, %v483
        %v502 = vunpack.c.l.b16 %v463
        %v503 = vunpack.c.l.b16 %v464
        %v504 = vunpack.c.l.b16 %v465
        %v505 = vunpack.c.l.b16 %v466
        %v506 = vunpack.c.l.b16 %v467
        %v507 = vunpack.c.l.b16 %v468
        %v508 = vunpack.c.l.b16 %v469
        %v509 = vunpack.c.l.b16 %v470
        %v510 = vunpack.c.l.b16 %v471
        %v511 = vunpack.c.l.b16 %v472
        %v512 = vunpack.c.l.b16 %v473
        %v513 = vunpack.c.l.b16 %v474
        %v514 = vunpack.c.l.b16 %v475
        %v515 = vunpack.c.l.b16 %v476
        %v516 = vunpack.c.l.b16 %v477
        %v517 = vunpack.c.l.b16 %v478
        %v518 = vpack.c.b16 %v503, %v502
        %v519 = vpack.c.b16 %v505, %v504
        %v520 = vpack.c.b16 %v507, %v506
        %v521 = vpack.c.b16 %v509, %v508
        %v522 = vpack.c.b16 %v511, %v510
        %v523 = vpack.c.b16 %v513, %v512
        %v524 = vpack.c.b16 %v515, %v514
        %v525 = vpack.c.b16 %v517, %v516
        %534 = vmatprep.subr.bf16.mxu0 0
        %535 = vmatpush1.bf16.msra.mxu0 %v518
        %536 = vmatprep.subr.bf16.mxu0 0
        %537 = vmatpush1.bf16.msra.mxu0 %v519
        %538 = vmatprep.subr.bf16.mxu0 0
        %539 = vmatpush1.bf16.msra.mxu0 %v520
        %540 = vmatprep.subr.bf16.mxu0 0
        %541 = vmatpush1.bf16.msra.mxu0 %v521
        %542 = vmatprep.subr.bf16.mxu0 0
        %543 = vmatpush1.bf16.msra.mxu0 %v522
        %544 = vmatprep.subr.bf16.mxu0 0
        %545 = vmatpush1.bf16.msra.mxu0 %v523
        %546 = vmatprep.subr.bf16.mxu0 0
        %547 = vmatpush1.bf16.msra.mxu0 %v524
        %548 = vmatprep.subr.bf16.mxu0 0
        %549 = vmatpush1.bf16.msra.mxu0 %v525
        %550 = vmatprep.subr.bf16.mxu0 0
        %551 = vmatpush1.bf16.msra.mxu0 0
        %552 = vmatprep.subr.bf16.mxu0 0
        %553 = vmatpush1.bf16.msra.mxu0 0
        %554 = vmatprep.subr.bf16.mxu0 0
        %555 = vmatpush1.bf16.msra.mxu0 0
        %556 = vmatprep.subr.bf16.mxu0 0
        %557 = vmatpush1.bf16.msra.mxu0 0
        %558 = vmatprep.subr.bf16.mxu0 0
        %559 = vmatpush1.bf16.msra.mxu0 0
        %560 = vmatprep.subr.bf16.mxu0 0
        %561 = vmatpush1.bf16.msra.mxu0 0
        %562 = vmatprep.subr.bf16.mxu0 0
        %563 = vmatpush1.bf16.msra.mxu0 0
        %564 = vmatprep.subr.bf16.mxu0 0
        %565 = vmatpush1.bf16.msra.mxu0 0
        %566 = vmatprep.mubr.bf16.mxu0 0
        %567 = vmatmul.mubr.bf16.gmra.mrb[0].mxu0 %v455
        %v568 = vpop.f32.mrb[0].mxu0
        %v569 = vadd.f32 %v484, %v568
        %v570 = vpop.f32.mrb[0].mxu0
        %v571 = vpop.f32.mrb[0].mxu0
        %v572 = vadd.f32 %v484, %v571
        %v573 = vpop.f32.mrb[0].mxu0
        %574 = vmatprep.mubr.bf16.mxu0 0
        %575 = vmatmul.mubr.bf16.gmra.mrb[0].mxu0 %v456
        %v576 = vpop.f32.mrb[0].mxu0
        %v577 = vadd.f32 %v484, %v576
        %v578 = vpop.f32.mrb[0].mxu0
        %v579 = vpop.f32.mrb[0].mxu0
        %v580 = vadd.f32 %v484, %v579
        %v581 = vpop.f32.mrb[0].mxu0
        %582 = vmatprep.mubr.bf16.mxu0 0
        %583 = vmatmul.mubr.bf16.gmra.mrb[0].mxu0 %v457
        %v584 = vpop.f32.mrb[0].mxu0
        %v585 = vadd.f32 %v484, %v584
        %v586 = vpop.f32.mrb[0].mxu0
        %v587 = vpop.f32.mrb[0].mxu0
        %v588 = vadd.f32 %v484, %v587
        %v589 = vpop.f32.mrb[0].mxu0
        %590 = vmatprep.mubr.bf16.mxu0 0
        %591 = vmatmul.mubr.bf16.gmra.mrb[0].mxu0 %v458
        %v592 = vpop.f32.mrb[0].mxu0
        %v593 = vadd.f32 %v484, %v592
        %v594 = vpop.f32.mrb[0].mxu0
        %v595 = vpop.f32.mrb[0].mxu0
        %v596 = vadd.f32 %v484, %v595
        %v597 = vpop.f32.mrb[0].mxu0
        %598 = vmatprep.mubr.bf16.mxu0 0
        %599 = vmatmul.mubr.bf16.gmra.mrb[0].mxu0 %v459
        %v600 = vpop.f32.mrb[0].mxu0
        %v601 = vadd.f32 %v484, %v600
        %v602 = vpop.f32.mrb[0].mxu0
        %v603 = vpop.f32.mrb[0].mxu0
        %v604 = vadd.f32 %v484, %v603
        %v605 = vpop.f32.mrb[0].mxu0
        %606 = vmatprep.mubr.bf16.mxu0 0
        %607 = vmatmul.mubr.bf16.gmra.mrb[0].mxu0 %v460
        %v608 = vpop.f32.mrb[0].mxu0
        %v609 = vadd.f32 %v484, %v608
        %v610 = vpop.f32.mrb[0].mxu0
        %v611 = vpop.f32.mrb[0].mxu0
        %v612 = vadd.f32 %v484, %v611
        %v613 = vpop.f32.mrb[0].mxu0
        %614 = vmatprep.mubr.bf16.mxu0 0
        %615 = vmatmul.mubr.bf16.gmra.mrb[0].mxu0 %v461
        %v616 = vpop.f32.mrb[0].mxu0
        %v617 = vadd.f32 %v484, %v616
        %v618 = vpop.f32.mrb[0].mxu0
        %v619 = vpop.f32.mrb[0].mxu0
        %v620 = vadd.f32 %v484, %v619
        %v621 = vpop.f32.mrb[0].mxu0
        %622 = vmatprep.mubr.bf16.mxu0 0
        %623 = vmatmul.mubr.bf16.gmra.mrb[0].mxu0 %v462
        %v624 = vpop.f32.mrb[0].mxu0
        %v625 = vadd.f32 %v484, %v624
        %v626 = vpop.f32.mrb[0].mxu0
        %v627 = vpop.f32.mrb[0].mxu0
        %v628 = vadd.f32 %v484, %v627
        %v629 = vpop.f32.mrb[0].mxu0
        %630 = vdwg.mxu0
        %v631 = vmax.f32 %v569, 0.0
        %v632 = vmax.f32 %v572, 0.0
        %v633 = vmax.f32 %v577, 0.0
        %v634 = vmax.f32 %v580, 0.0
        %v635 = vmax.f32 %v585, 0.0
        %v636 = vmax.f32 %v588, 0.0
        %v637 = vmax.f32 %v593, 0.0
        %v638 = vmax.f32 %v596, 0.0
        %v639 = vmax.f32 %v601, 0.0
        %v640 = vmax.f32 %v604, 0.0
        %v641 = vmax.f32 %v609, 0.0
        %v642 = vmax.f32 %v612, 0.0
        %v643 = vmax.f32 %v617, 0.0
        %v644 = vmax.f32 %v620, 0.0
        %v645 = vmax.f32 %v625, 0.0
        %v646 = vmax.f32 %v628, 0.0
        %v647 = vpack.c.bf16 %v632, %v631
        %v648 = vpack.c.bf16 %v634, %v633
        %v649 = vpack.c.bf16 %v636, %v635
        %v650 = vpack.c.bf16 %v638, %v637
        %v651 = vpack.c.bf16 %v640, %v639
        %v652 = vpack.c.bf16 %v642, %v641
        %v653 = vpack.c.bf16 %v644, %v643
        %v654 = vpack.c.bf16 %v646, %v645
        %v655 = vld [vmem:[%s5] sm:$0xf]
        %v656 = vld [vmem:[%s5 + $0x4] sm:$0xf]
        %v657 = vld [vmem:[%s5 + $0x8] sm:$0xf]
        %v658 = vld [vmem:[%s5 + $0xc] sm:$0xf]
        %v659 = vld [vmem:[%s5 + $0x10] sm:$0xf]
        %v660 = vld [vmem:[%s5 + $0x14] sm:$0xf]
        %v661 = vld [vmem:[%s5 + $0x18] sm:$0xf]
        %v662 = vld [vmem:[%s5 + $0x1c] sm:$0xf]
        %v663 = vld [vmem:[%s5 + $0x20] sm:$0xf]
        %v664 = vld [vmem:[%s5 + $0x24] sm:$0xf]
        %v665 = vld [vmem:[%s5 + $0x28] sm:$0xf]
        %v666 = vld [vmem:[%s5 + $0x2c] sm:$0xf]
        %v667 = vld [vmem:[%s5 + $0x30] sm:$0xf]
        %v668 = vld [vmem:[%s5 + $0x34] sm:$0xf]
        %v669 = vld [vmem:[%s5 + $0x38] sm:$0xf]
        %v670 = vld [vmem:[%s5 + $0x3c] sm:$0xf]
        %v671 = vld [vmem:[%s6] sm:$0x1]
        %v673 = vlaneseq
        %v674 = vshrl.u32 %v673, 7
        %v675 = vsub.s32 0, %v674
        %v676 = vrot.slane %v671, %v675
        %v694 = vunpack.c.l.b16 %v655
        %v695 = vunpack.c.l.b16 %v656
        %v696 = vunpack.c.l.b16 %v657
        %v697 = vunpack.c.l.b16 %v658
        %v698 = vunpack.c.l.b16 %v659
        %v699 = vunpack.c.l.b16 %v660
        %v700 = vunpack.c.l.b16 %v661
        %v701 = vunpack.c.l.b16 %v662
        %v702 = vunpack.c.l.b16 %v663
        %v703 = vunpack.c.l.b16 %v664
        %v704 = vunpack.c.l.b16 %v665
        %v705 = vunpack.c.l.b16 %v666
        %v706 = vunpack.c.l.b16 %v667
        %v707 = vunpack.c.l.b16 %v668
        %v708 = vunpack.c.l.b16 %v669
        %v709 = vunpack.c.l.b16 %v670
        %v710 = vpack.c.b16 %v695, %v694
        %v711 = vpack.c.b16 %v697, %v696
        %v712 = vpack.c.b16 %v699, %v698
        %v713 = vpack.c.b16 %v701, %v700
        %v714 = vpack.c.b16 %v703, %v702
        %v715 = vpack.c.b16 %v705, %v704
        %v716 = vpack.c.b16 %v707, %v706
        %v717 = vpack.c.b16 %v709, %v708
        %726 = vmatprep.subr.bf16.mxu0 0
        %727 = vmatpush1.bf16.msra.mxu0 %v710
        %728 = vmatprep.subr.bf16.mxu0 0
        %729 = vmatpush1.bf16.msra.mxu0 %v711
        %730 = vmatprep.subr.bf16.mxu0 0
        %731 = vmatpush1.bf16.msra.mxu0 %v712
        %732 = vmatprep.subr.bf16.mxu0 0
        %733 = vmatpush1.bf16.msra.mxu0 %v713
        %734 = vmatprep.subr.bf16.mxu0 0
        %735 = vmatpush1.bf16.msra.mxu0 %v714
        %736 = vmatprep.subr.bf16.mxu0 0
        %737 = vmatpush1.bf16.msra.mxu0 %v715
        %738 = vmatprep.subr.bf16.mxu0 0
        %739 = vmatpush1.bf16.msra.mxu0 %v716
        %740 = vmatprep.subr.bf16.mxu0 0
        %741 = vmatpush1.bf16.msra.mxu0 %v717
        %742 = vmatprep.subr.bf16.mxu0 0
        %743 = vmatpush1.bf16.msra.mxu0 0
        %744 = vmatprep.subr.bf16.mxu0 0
        %745 = vmatpush1.bf16.msra.mxu0 0
        %746 = vmatprep.subr.bf16.mxu0 0
        %747 = vmatpush1.bf16.msra.mxu0 0
        %748 = vmatprep.subr.bf16.mxu0 0
        %749 = vmatpush1.bf16.msra.mxu0 0
        %750 = vmatprep.subr.bf16.mxu0 0
        %751 = vmatpush1.bf16.msra.mxu0 0
        %752 = vmatprep.subr.bf16.mxu0 0
        %753 = vmatpush1.bf16.msra.mxu0 0
        %754 = vmatprep.subr.bf16.mxu0 0
        %755 = vmatpush1.bf16.msra.mxu0 0
        %756 = vmatprep.subr.bf16.mxu0 0
        %757 = vmatpush1.bf16.msra.mxu0 0
        %758 = vmatprep.mubr.bf16.mxu0 0
        %759 = vmatmul.mubr.bf16.gmra.mrb[0].mxu0 %v647
        %v760 = vpop.f32.mrb[0].mxu0
        %v761 = vadd.f32 %v676, %v760
        %v762 = vpop.f32.mrb[0].mxu0
        %v763 = vpop.f32.mrb[0].mxu0
        %v764 = vadd.f32 %v676, %v763
        %v765 = vpop.f32.mrb[0].mxu0
        %766 = vmatprep.mubr.bf16.mxu0 0
        %767 = vmatmul.mubr.bf16.gmra.mrb[0].mxu0 %v648
        %v768 = vpop.f32.mrb[0].mxu0
        %v769 = vadd.f32 %v676, %v768
        %v770 = vpop.f32.mrb[0].mxu0
        %v771 = vpop.f32.mrb[0].mxu0
        %v772 = vadd.f32 %v676, %v771
        %v773 = vpop.f32.mrb[0].mxu0
        %774 = vmatprep.mubr.bf16.mxu0 0
        %775 = vmatmul.mubr.bf16.gmra.mrb[0].mxu0 %v649
        %v776 = vpop.f32.mrb[0].mxu0
        %v777 = vadd.f32 %v676, %v776
        %v778 = vpop.f32.mrb[0].mxu0
        %v779 = vpop.f32.mrb[0].mxu0
        %v780 = vadd.f32 %v676, %v779
        %v781 = vpop.f32.mrb[0].mxu0
        %782 = vmatprep.mubr.bf16.mxu0 0
        %783 = vmatmul.mubr.bf16.gmra.mrb[0].mxu0 %v650
        %v784 = vpop.f32.mrb[0].mxu0
        %v785 = vadd.f32 %v676, %v784
        %v786 = vpop.f32.mrb[0].mxu0
        %v787 = vpop.f32.mrb[0].mxu0
        %v788 = vadd.f32 %v676, %v787
        %v789 = vpop.f32.mrb[0].mxu0
        %790 = vmatprep.mubr.bf16.mxu0 0
        %791 = vmatmul.mubr.bf16.gmra.mrb[0].mxu0 %v651
        %v792 = vpop.f32.mrb[0].mxu0
        %v793 = vadd.f32 %v676, %v792
        %v794 = vpop.f32.mrb[0].mxu0
        %v795 = vpop.f32.mrb[0].mxu0
        %v796 = vadd.f32 %v676, %v795
        %v797 = vpop.f32.mrb[0].mxu0
        %798 = vmatprep.mubr.bf16.mxu0 0
        %799 = vmatmul.mubr.bf16.gmra.mrb[0].mxu0 %v652
        %v800 = vpop.f32.mrb[0].mxu0
        %v801 = vadd.f32 %v676, %v800
        %v802 = vpop.f32.mrb[0].mxu0
        %v803 = vpop.f32.mrb[0].mxu0
        %v804 = vadd.f32 %v676, %v803
        %v805 = vpop.f32.mrb[0].mxu0
        %806 = vmatprep.mubr.bf16.mxu0 0
        %807 = vmatmul.mubr.bf16.gmra.mrb[0].mxu0 %v653
        %v808 = vpop.f32.mrb[0].mxu0
        %v809 = vadd.f32 %v676, %v808
        %v810 = vpop.f32.mrb[0].mxu0
        %v811 = vpop.f32.mrb[0].mxu0
        %v812 = vadd.f32 %v676, %v811
        %v813 = vpop.f32.mrb[0].mxu0
        %814 = vmatprep.mubr.bf16.mxu0 0
        %815 = vmatmul.mubr.bf16.gmra.mrb[0].mxu0 %v654
        %v816 = vpop.f32.mrb[0].mxu0
        %v817 = vadd.f32 %v676, %v816
        %v818 = vpop.f32.mrb[0].mxu0
        %v819 = vpop.f32.mrb[0].mxu0
        %v820 = vadd.f32 %v676, %v819
        %v821 = vpop.f32.mrb[0].mxu0
        %822 = vdwg.mxu0
        %v823 = vpack.c.bf16 %v764, %v761
        %v824 = vpack.c.bf16 %v772, %v769
        %v825 = vpack.c.bf16 %v780, %v777
        %v826 = vpack.c.bf16 %v788, %v785
        %v827 = vpack.c.bf16 %v796, %v793
        %v828 = vpack.c.bf16 %v804, %v801
        %v829 = vpack.c.bf16 %v812, %v809
        %v830 = vpack.c.bf16 %v820, %v817
        %v839 = vunpack.c.l.b16 %v823
        %v840 = vunpack.c.h.b16 %v823
        %v841 = vunpack.c.l.b16 %v824
        %v842 = vunpack.c.h.b16 %v824
        %v843 = vunpack.c.l.b16 %v825
        %v844 = vunpack.c.h.b16 %v825
        %v845 = vunpack.c.l.b16 %v826
        %v846 = vunpack.c.h.b16 %v826
        %v847 = vunpack.c.l.b16 %v827
        %v848 = vunpack.c.h.b16 %v827
        %v849 = vunpack.c.l.b16 %v828
        %v850 = vunpack.c.h.b16 %v828
        %v851 = vunpack.c.l.b16 %v829
        %v852 = vunpack.c.h.b16 %v829
        %v853 = vunpack.c.l.b16 %v830
        %v854 = vunpack.c.h.b16 %v830
        %v855 = vpack.c.b16 %v839, %v839
        %v856 = vpack.c.b16 %v840, %v840
        %v857 = vpack.c.b16 %v841, %v841
        %v858 = vpack.c.b16 %v842, %v842
        %v859 = vpack.c.b16 %v843, %v843
        %v860 = vpack.c.b16 %v844, %v844
        %v861 = vpack.c.b16 %v845, %v845
        %v862 = vpack.c.b16 %v846, %v846
        %v863 = vpack.c.b16 %v847, %v847
        %v864 = vpack.c.b16 %v848, %v848
        %v865 = vpack.c.b16 %v849, %v849
        %v866 = vpack.c.b16 %v850, %v850
        %v867 = vpack.c.b16 %v851, %v851
        %v868 = vpack.c.b16 %v852, %v852
        %v869 = vpack.c.b16 %v853, %v853
        %v870 = vpack.c.b16 %v854, %v854
        %887 = vst [vmem:[%s272] sm:$0xf] %v855
        %888 = vst [vmem:[%s272 + $0x4] sm:$0xf] %v856
        %889 = vst [vmem:[%s272 + $0x8] sm:$0xf] %v857
        %890 = vst [vmem:[%s272 + $0xc] sm:$0xf] %v858
        %891 = vst [vmem:[%s272 + $0x10] sm:$0xf] %v859
        %892 = vst [vmem:[%s272 + $0x14] sm:$0xf] %v860
        %893 = vst [vmem:[%s272 + $0x18] sm:$0xf] %v861
        %894 = vst [vmem:[%s272 + $0x1c] sm:$0xf] %v862
        %895 = vst [vmem:[%s272 + $0x20] sm:$0xf] %v863
        %896 = vst [vmem:[%s272 + $0x24] sm:$0xf] %v864
        %897 = vst [vmem:[%s272 + $0x28] sm:$0xf] %v865
        %898 = vst [vmem:[%s272 + $0x2c] sm:$0xf] %v866
        %899 = vst [vmem:[%s272 + $0x30] sm:$0xf] %v867
        %900 = vst [vmem:[%s272 + $0x34] sm:$0xf] %v868
        %901 = vst [vmem:[%s272 + $0x38] sm:$0xf] %v869
        %902 = vst [vmem:[%s272 + $0x3c] sm:$0xf] %v870
        %s903 = sand.u32 %s181, 1
        %s904 = scalar_lea.sflag [#allocation3], %s903
        %s905 = sand.u32 %s181, 1
        %s906 = smul.addr %s905, 64
        %s907 = scalar_lea.vmem [#allocation2], %s906
        // Predicated region
        $region49: #{tpu_custom_call.1} parent=47 // pred_check
          %p908 = pneg %p191
        $region50: #{tpu_custom_call.1} parent=47 // pred_check_branch
          %910 = sbr.rel (%p908) target = $region52
        $region51: #{tpu_custom_call.1} parent=47 // pred_region
          %s911 = smul.u32 16, %s21
          %s913 = ssub.s32 1024, 1024
          %914 = vsyncadd %s904, %s913
          %s915 = smul.addr %s911, 64
          %s916 = scalar_lea.hbm %s7, %s915
          %s917 = sshll.u32 %s907, 4
          %s918 = int_to_ptr.vmem [resolvable:$true] %s917
          %923 = dma.vmem_to_hbm [thread:$0]  %s918, 1024, %s916, %s904, 64, 64, 4
        $region52: #{tpu_custom_call.1} parent=47 // pred_fallthru
          _
      $region48: #{tpu_custom_call.1} parent=5 // pred_fallthru
        _
      %p924 = scmp.le.s32.totalorder 2, %s16
      // Predicated region
      $region53: #{tpu_custom_call.1} parent=5 // pred_check
        %p925 = pneg %p924
      $region54: #{tpu_custom_call.1} parent=5 // pred_check_branch
        %927 = sbr.rel (%p925) target = $region56
      $region55: #{tpu_custom_call.1} parent=5 // pred_region
        %s928 = ssub.s32 %s16, 2
        // Predicated region
        $region57: #{tpu_custom_call.1} parent=55 // pred_check
          %p929 = pneg %p197
        $region58: #{tpu_custom_call.1} parent=55 // pred_check_branch
          %931 = sbr.rel (%p929) target = $region60
        $region59: #{tpu_custom_call.1} parent=55 // pred_region
          %s932 = sand.u32 %s182, 1
          %s933 = scalar_lea.sflag [#allocation3], %s932
          %s934 = sand.u32 %s182, 1
          %s935 = smul.addr %s934, 64
          %s936 = scalar_lea.vmem [#allocation2], %s935
          %937 = dma.done %s933, 1024
        $region60: #{tpu_custom_call.1} parent=55 // pred_fallthru
          _
      $region56: #{tpu_custom_call.1} parent=5 // pred_fallthru
        _
    $region6: #{tpu_custom_call.1} parent=1 // loop_footer
      %s20 = sadd.s32 1, %s16
    $region7: #{tpu_custom_call.1} parent=1 // loop_footer_branch
      %15 = sbr.rel target = $region3
    $region8: #{tpu_custom_call.1} parent=1 // loop_exit
      _
    %938 = vsyncpa [#allocation3], 1
    %s939 = scalar_lea.sflag [#allocation3], 1
    %940 = vsyncpa %s939, 1

</llo_original>
